<compile_context>
chip_gen: v5e
topology: v5e:2x2
jax: 0.10.0
libtpu: 0.0.40
codegen_flags: <defaults>
</compile_context>

<pallas_src>
import math
from functools import partial

import jax
import jax.numpy as jnp
import numpy as np
from jax.experimental import pallas as pl
from jax.experimental.pallas import tpu as pltpu


# ----------------------------- Pallas kernel ------------------------------ #
def _data_embedding_kernel(x_ref, w_ref, pe_ref, o_ref, lhs_ref, *,
                           seq_len, batch_tile):
    # x_ref  : (bt*L, C)    flattened (batch, seq) rows for this grid step
    # w_ref  : (3*C, D)     fused conv taps [w(t-1); w(t); w(t+1)]
    # pe_ref : (bt*L, D)    positional embedding, pre-tiled over the batch tile
    # o_ref  : (bt*L, D)
    # lhs_ref: (bt*L, 3*C)  VMEM scratch holding the fused circular-conv LHS
    L, bt = seq_len, batch_tile
    M, C = x_ref.shape                      # M == bt * L (static ints)
    x = x_ref[...]                          # (M, C)

    # Build the fused LHS in VMEM (no HBM pad pass):
    #   lhs[r, 0:C]   = x[t-1]  (circular within each length-L batch segment)
    #   lhs[r, C:2C]  = x[t]
    #   lhs[r, 2C:3C] = x[t+1]  (circular within each length-L batch segment)
    lhs_ref[:, C:2 * C] = x                                   # center tap
    lhs_ref[1:M, 0:C] = x[0:M - 1, :]                         # prev tap, bulk
    lhs_ref[0:M - 1, 2 * C:3 * C] = x[1:M, :]                 # next tap, bulk
    # Fix the circular wrap rows of each batch segment. bt is bounded by the
    # VMEM-derived batch tile, so this static loop unrolls cheaply.
    for b in range(bt):
        lo, hi = b * L, (b + 1) * L
        lhs_ref[lo:lo + 1, 0:C] = x[hi - 1:hi, :]             # row lo's x[t-1]
        lhs_ref[hi - 1:hi, 2 * C:3 * C] = x[lo:lo + 1, :]     # row hi-1's x[t+1]

    # One fused K = 3*C MXU push instead of three K=C matmuls + two adds.
    y = jnp.dot(lhs_ref[...], w_ref[...], preferred_element_type=jnp.float32)

    # TODO(synk): dropout is identity here (eval mode); training-mode dropout
    # would use pltpu.prng_seed / pltpu.stateful_bernoulli.
    o_ref[...] = (y + pe_ref[...]).astype(o_ref.dtype)


def _pick_batch_tile(B, L, C, D, itemsize, vmem_budget_bytes=8 * 1024 * 1024):
    # Per-batch-element live VMEM: double-buffered x & out blocks + LHS scratch.
    per_b = L * (2 * C + 2 * D + 3 * C) * itemsize
    bt = max(1, min(B, vmem_budget_bytes // max(per_b, 1)))
    while B % bt:            # keep B divisible so every block is full
        bt -= 1
    return bt


def data_embedding(x, w, pe, *, batch_tile=None):
    """x: (B, L, C), w: (3, C, D) conv taps, pe: (L, D) -> (B, L, D)."""
    B, L, C = x.shape
    D = w.shape[-1]
    assert w.shape == (3, C, D)
    assert pe.shape == (L, D)

    bt = batch_tile if batch_tile is not None else _pick_batch_tile(
        B, L, C, D, x.dtype.itemsize)
    assert B % bt == 0

    x2d = x.reshape(B * L, C)            # free (metadata-only) reshape
    w_fused = w.reshape(3 * C, D)        # taps stacked along the contraction dim
    pe_tiled = jnp.tile(pe, (bt, 1))     # (bt*L, D), resident across grid steps

    itemsize = x.dtype.itemsize
    grid = (B // bt,)
    kernel = partial(_data_embedding_kernel, seq_len=L, batch_tile=bt)

    out2d = pl.pallas_call(
        kernel,
        out_shape=jax.ShapeDtypeStruct((B * L, D), x.dtype),
        grid_spec=pltpu.PrefetchScalarGridSpec(
            num_scalar_prefetch=0,
            grid=grid,
            in_specs=[
                pl.BlockSpec((bt * L, C), lambda b: (b, 0)),
                pl.BlockSpec((3 * C, D), lambda b: (0, 0)),
                pl.BlockSpec((bt * L, D), lambda b: (0, 0)),
            ],
            out_specs=pl.BlockSpec((bt * L, D), lambda b: (b, 0)),
            scratch_shapes=[pltpu.VMEM((bt * L, 3 * C), jnp.float32)],
        ),
        compiler_params=pltpu.CompilerParams(
            dimension_semantics=("parallel",)),   # batch axis: no accumulator
        cost_estimate=pl.CostEstimate(
            flops=2 * B * L * (3 * C) * D,
            transcendentals=0,
            bytes_accessed=itemsize * (B * L * C + 3 * C * D
                                       + bt * L * D + B * L * D)),
    )(x2d, w_fused, pe_tiled)

    return out2d.reshape(B, L, D)


# ------------------------- parameter construction ------------------------- #
def make_positional_embedding(max_len, d_model):
    position = np.arange(max_len, dtype=np.float32)[:, None]            # (max_len, 1)
    div_term = np.exp(
        np.arange(0, d_model, 2, dtype=np.float32) *
        (-(math.log(10000.0) / d_model)))                                # (d_model/2,)
    pe = np.zeros((max_len, d_model), dtype=np.float32)
    pe[:, 0::2] = np.sin(position * div_term)
    pe[:, 1::2] = np.cos(position * div_term)
    return jnp.asarray(pe)                                               # (max_len, D)


def make_token_conv_weight(key, c_in, d_model):
    # kaiming_normal_(mode='fan_in', nonlinearity='leaky_relu', a=0.01 default)
    fan_in = c_in * 3
    gain = math.sqrt(2.0 / (1.0 + 0.01 ** 2))
    std = gain / math.sqrt(fan_in)
    w_torch = jax.random.normal(key, (d_model, c_in, 3), dtype=jnp.float32) * std
    # rearrange to (k, c_in, d_model) for the kernel
    return jnp.transpose(w_torch, (2, 1, 0))


# ------------------------------ reference --------------------------------- #
def data_embedding_ref(x, w, pe):
    # circular conv via rolls in plain JAX
    x_prev = jnp.roll(x, 1, axis=1)    # x[t-1]
    x_next = jnp.roll(x, -1, axis=1)   # x[t+1]
    y = (jnp.einsum('blc,cd->bld', x_prev, w[0]) +
         jnp.einsum('blc,cd->bld', x,      w[1]) +
         jnp.einsum('blc,cd->bld', x_next, w[2]))
    return y + pe[None]


# --------------------------------- main ------------------------------------ #
if __name__ == "__main__":
    B, L, C_IN, D_MODEL = 2, 8, 4, 32

    key = jax.random.PRNGKey(0)
    kx, kw = jax.random.split(key)

    x = jax.random.normal(kx, (B, L, C_IN), dtype=jnp.float32)
    w = make_token_conv_weight(kw, C_IN, D_MODEL)          # (3, C, D)
    pe_full = make_positional_embedding(5000, D_MODEL)     # (5000, D)
    pe = pe_full[:L]                                       # (L, D)

    out = data_embedding(x, w, pe)
    out = jax.block_until_ready(out)

    ref = data_embedding_ref(x, w, pe)
    assert out.shape == (B, L, D_MODEL)
    np.testing.assert_allclose(np.asarray(out), np.asarray(ref),
                               rtol=1e-5, atol=1e-5)
    print("KERNEL_OK")
</pallas_src>

<mosaic_0001>
module attributes {stable_mosaic.version = 11 : i64} {
  func.func @_data_embedding_kernel(%arg0: i32, %arg1: memref<16x4xf32, #tpu.memory_space<vmem>>, %arg2: memref<12x32xf32, #tpu.memory_space<vmem>>, %arg3: memref<16x32xf32, #tpu.memory_space<vmem>>, %arg4: memref<16x32xf32, #tpu.memory_space<vmem>>, %arg5: memref<16x12xf32, #tpu.memory_space<vmem>>) attributes {dimension_semantics = [#tpu.dimension_semantics<parallel>], iteration_bounds = array<i64: 1>, scalar_prefetch = 0 : i64, scratch_operands = 1 : i64, tpu.core_type = #tpu.core_type<tc>, window_params = [{transform_indices = @transform_0, window_bounds = array<i64: 16, 4>}, {pipeline_mode = #tpu.pipeline_mode<synchronous>, transform_indices = @transform_1, window_bounds = array<i64: 12, 32>}, {pipeline_mode = #tpu.pipeline_mode<synchronous>, transform_indices = @transform_2, window_bounds = array<i64: 16, 32>}, {transform_indices = @transform_3, window_bounds = array<i64: 16, 32>}]} {
    %c0 = arith.constant 0 : index
    %c0_0 = arith.constant 0 : index
    %0 = vector.load %arg1[%c0, %c0_0] : memref<16x4xf32, #tpu.memory_space<vmem>>, vector<16x4xf32>
    %c0_1 = arith.constant 0 : index
    %c4 = arith.constant 4 : index
    %1 = vector.load %arg5[%c0_1, %c4] : memref<16x12xf32, #tpu.memory_space<vmem>>, vector<16x4xf32>
    tpu.vector_store %arg5[%c0_1, %c4], %0 {strides = array<i32>} : memref<16x12xf32, #tpu.memory_space<vmem>>, vector<16x4xf32>,
    %2 = vector.extract_strided_slice %0 {offsets = [0, 0], sizes = [15, 4], strides = [1, 1]} : vector<16x4xf32> to vector<15x4xf32>
    %c1 = arith.constant 1 : index
    %c0_2 = arith.constant 0 : index
    %3 = vector.load %arg5[%c1, %c0_2] : memref<16x12xf32, #tpu.memory_space<vmem>>, vector<15x4xf32>
    tpu.vector_store %arg5[%c1, %c0_2], %2 {strides = array<i32>} : memref<16x12xf32, #tpu.memory_space<vmem>>, vector<15x4xf32>,
    %4 = vector.extract_strided_slice %0 {offsets = [1, 0], sizes = [15, 4], strides = [1, 1]} : vector<16x4xf32> to vector<15x4xf32>
    %c0_3 = arith.constant 0 : index
    %c8 = arith.constant 8 : index
    %5 = vector.load %arg5[%c0_3, %c8] : memref<16x12xf32, #tpu.memory_space<vmem>>, vector<15x4xf32>
    tpu.vector_store %arg5[%c0_3, %c8], %4 {strides = array<i32>} : memref<16x12xf32, #tpu.memory_space<vmem>>, vector<15x4xf32>,
    %6 = vector.extract_strided_slice %0 {offsets = [7, 0], sizes = [1, 4], strides = [1, 1]} : vector<16x4xf32> to vector<1x4xf32>
    %c0_4 = arith.constant 0 : index
    %c0_5 = arith.constant 0 : index
    %7 = vector.load %arg5[%c0_4, %c0_5] : memref<16x12xf32, #tpu.memory_space<vmem>>, vector<1x4xf32>
    tpu.vector_store %arg5[%c0_4, %c0_5], %6 {strides = array<i32>} : memref<16x12xf32, #tpu.memory_space<vmem>>, vector<1x4xf32>,
    %8 = vector.extract_strided_slice %0 {offsets = [0, 0], sizes = [1, 4], strides = [1, 1]} : vector<16x4xf32> to vector<1x4xf32>
    %c7 = arith.constant 7 : index
    %c8_6 = arith.constant 8 : index
    %9 = vector.load %arg5[%c7, %c8_6] : memref<16x12xf32, #tpu.memory_space<vmem>>, vector<1x4xf32>
    tpu.vector_store %arg5[%c7, %c8_6], %8 {strides = array<i32>} : memref<16x12xf32, #tpu.memory_space<vmem>>, vector<1x4xf32>,
    %10 = vector.extract_strided_slice %0 {offsets = [15, 0], sizes = [1, 4], strides = [1, 1]} : vector<16x4xf32> to vector<1x4xf32>
    %c8_7 = arith.constant 8 : index
    %c0_8 = arith.constant 0 : index
    %11 = vector.load %arg5[%c8_7, %c0_8] : memref<16x12xf32, #tpu.memory_space<vmem>>, vector<1x4xf32>
    tpu.vector_store %arg5[%c8_7, %c0_8], %10 {strides = array<i32>} : memref<16x12xf32, #tpu.memory_space<vmem>>, vector<1x4xf32>,
    %12 = vector.extract_strided_slice %0 {offsets = [8, 0], sizes = [1, 4], strides = [1, 1]} : vector<16x4xf32> to vector<1x4xf32>
    %c15 = arith.constant 15 : index
    %c8_9 = arith.constant 8 : index
    %13 = vector.load %arg5[%c15, %c8_9] : memref<16x12xf32, #tpu.memory_space<vmem>>, vector<1x4xf32>
    tpu.vector_store %arg5[%c15, %c8_9], %12 {strides = array<i32>} : memref<16x12xf32, #tpu.memory_space<vmem>>, vector<1x4xf32>,
    %c0_10 = arith.constant 0 : index
    %c0_11 = arith.constant 0 : index
    %14 = vector.load %arg5[%c0_10, %c0_11] : memref<16x12xf32, #tpu.memory_space<vmem>>, vector<16x12xf32>
    %c0_12 = arith.constant 0 : index
    %c0_13 = arith.constant 0 : index
    %15 = vector.load %arg2[%c0_12, %c0_13] : memref<12x32xf32, #tpu.memory_space<vmem>>, vector<12x32xf32>
    %cst = arith.constant dense<0.000000e+00> : vector<16x32xf32>
    %16 = tpu.matmul %14, %15, %cst {dimension_numbers = #tpu.dot_dimension_numbers<[1], [0], [0], [1], [0, 0, 1, 1], [], []>} : vector<16x12xf32>, vector<12x32xf32>, vector<16x32xf32> -> vector<16x32xf32>
    %c0_14 = arith.constant 0 : index
    %c0_15 = arith.constant 0 : index
    %17 = vector.load %arg3[%c0_14, %c0_15] : memref<16x32xf32, #tpu.memory_space<vmem>>, vector<16x32xf32>
    %18 = arith.addf %16, %17 : vector<16x32xf32>
    %c0_16 = arith.constant 0 : index
    %c0_17 = arith.constant 0 : index
    %19 = vector.load %arg4[%c0_16, %c0_17] : memref<16x32xf32, #tpu.memory_space<vmem>>, vector<16x32xf32>
    tpu.vector_store %arg4[%c0_16, %c0_17], %18 {strides = array<i32>} : memref<16x32xf32, #tpu.memory_space<vmem>>, vector<16x32xf32>,
    return
  }
  func.func @transform_0(%arg0: i32) -> (i32, i32) {
    %c0_i32 = arith.constant 0 : i32
    %c0_i32_0 = arith.constant 0 : i32
    return %arg0, %c0_i32 : i32, i32
  }
  func.func @transform_1(%arg0: i32) -> (i32, i32) {
    %c0_i32 = arith.constant 0 : i32
    %c0_i32_0 = arith.constant 0 : i32
    %c0_i32_1 = arith.constant 0 : i32
    return %c0_i32, %c0_i32_0 : i32, i32
  }
  func.func @transform_2(%arg0: i32) -> (i32, i32) {
    %c0_i32 = arith.constant 0 : i32
    %c0_i32_0 = arith.constant 0 : i32
    %c0_i32_1 = arith.constant 0 : i32
    return %c0_i32, %c0_i32_0 : i32, i32
  }
  func.func @transform_3(%arg0: i32) -> (i32, i32) {
    %c0_i32 = arith.constant 0 : i32
    %c0_i32_0 = arith.constant 0 : i32
    return %arg0, %c0_i32 : i32, i32
  }
}

</mosaic_0001>

<llo_original>
// kernel: tpu_custom_call.1
$region0: #{tpu_custom_call.1}
  #allocation0 [shape = 'u32[]', space=smem, size = 0x4, offset = 0x4, fixed_abs, tag = 'smem constant byte address 0x4 - core index']
  #allocation1 [shape = 'u32[72,128]{1,0:T(1,128)}', space=vmem, size = 0x9000, scoped, tag = 'internal scratch']
  #allocation2 [shape = 'f32[16,12]{1,0:T(8,128)}', space=vmem, size = 0x2000, scoped, tag = 'scratch operand']
  %s0 = inlined_call_operand.vmem [shape: f32[16,4], index: 0, kind: input, shape index: {}]
  %s1 = inlined_call_operand.vmem [shape: f32[12,32], index: 1, kind: input, shape index: {}]
  %s2 = inlined_call_operand.hbm [shape: f32[16,32], index: 2, kind: input, shape index: {}]
  %s3 = inlined_call_operand.hbm [shape: f32[16,32], index: 3, kind: output, shape index: {}]
  %s4 = sld [smem:[#allocation0]]
  $region26: #{tpu_custom_call.1} parent=0
    _
  %s6 = ssub.s32 1, %s4
  %s7 = scalar_select 0, %s6, %s4
  $region1: #{tpu_custom_call.1} parent=0
    #allocation3 [shape = 'u8[8192]{0}', space=vmem, size = 0x2000, scoped, tag = 'input window, operand 2, single buffered']
    #allocation4 [shape = 's32[1]{0}', space=sflag, size = 0x4, scoped, tag = 'scoped memory for tpu_custom_call.1']
    #allocation5 [shape = 's32[1]{0}', space=sflag, size = 0x4, scoped, tag = 'scoped memory for tpu_custom_call.1']
    #allocation6 [shape = 'u8[8192]{0}', space=vmem, size = 0x2000, scoped, tag = 'output window, operand 0, single buffered']
    %8 = vsyncpa [#allocation4], 0
    %9 = vsyncpa [#allocation5], 0
    // Predicated region
    $region2: #{tpu_custom_call.1} parent=1 // pred_check
      _
    $region3: #{tpu_custom_call.1} parent=1 // pred_check_branch
      %11 = sbr.rel (0) target = $region5
    $region4: #{tpu_custom_call.1} parent=1 // pred_region
      _
    $region5: #{tpu_custom_call.1} parent=1 // pred_fallthru
      _
    // Predicated region
    $region6: #{tpu_custom_call.1} parent=1 // pred_check
      _
    $region7: #{tpu_custom_call.1} parent=1 // pred_check_branch
      %13 = sbr.rel (0) target = $region9
    $region8: #{tpu_custom_call.1} parent=1 // pred_region
      _
    $region9: #{tpu_custom_call.1} parent=1 // pred_fallthru
      _
    // Predicated region
    $region10: #{tpu_custom_call.1} parent=1 // pred_check
      _
    $region11: #{tpu_custom_call.1} parent=1 // pred_check_branch
      %15 = sbr.rel (0) target = $region13
    $region12: #{tpu_custom_call.1} parent=1 // pred_region
      %17 = vsyncadd [#allocation4], 0
      %s18 = sshll.u32 %s2, 4
      %s19 = int_to_ptr.hbm [resolvable:$true] %s18
      %s20 = sshll.u32 [#allocation3], 4
      %s21 = int_to_ptr.vmem [resolvable:$true] %s20
      %26 = dma.hbm_to_vmem [thread:$0]  %s19, 256, %s21, [#allocation4], 128, 128, 8
    $region13: #{tpu_custom_call.1} parent=1 // pred_fallthru
      _
    // Predicated region
    $region14: #{tpu_custom_call.1} parent=1 // pred_check
      _
    $region15: #{tpu_custom_call.1} parent=1 // pred_check_branch
      %28 = sbr.rel (0) target = $region17
    $region16: #{tpu_custom_call.1} parent=1 // pred_region
      %30 = dma.done [#allocation4], 256
    $region17: #{tpu_custom_call.1} parent=1 // pred_fallthru
      _
    %v31 = vld [vmem:[%s0] sm:$0xff]
    %v32 = vld [vmem:[%s0 + $0x8] sm:$0xff]
    %35 = vrot.lane.b32.xlu0 %v31, 4
    %v36 = vpop.permute.xlu0 %35
    %37 = vrot.lane.b32.xlu0 %v32, 4
    %v38 = vpop.permute.xlu0 %37
    %vm41 = vcmask 64544
    %42 = vst.msk [vmem:[#allocation2] sm:$0xff] %vm41, %v36
    %43 = vst.msk [vmem:[#allocation2 + $0x8] sm:$0xff] %vm41, %v38
    %vm44 = vcmask 31744
    %45 = vst.msk [vmem:[#allocation2 + $0x1] sm:$0xff] %vm44, %v31
    %vm46 = vcmask 30720
    %47 = vst.msk [vmem:[#allocation2 + $0x9] sm:$0x7f] %vm46, %v32
    %48 = vrot.lane.b32.xlu0 %v31, 8
    %v49 = vpop.permute.xlu0 %48
    %50 = vrot.lane.b32.xlu0 %v32, 8
    %v51 = vpop.permute.xlu0 %50
    %vm54 = vcmask 97345
    %55 = vst.msk [vmem:[#allocation2 - $0x1] sm:$0xfe] %vm54, %v49
    %vm56 = vcmask 97344
    %57 = vst.msk [vmem:[#allocation2 + $0x7] sm:$0xff] %vm56, %v51
    %vm58 = vcmask 31751
    %59 = vst.msk [vmem:[#allocation2 - $0x7] sm:$0x80] %vm58, %v31
    %vm60 = vcmask 90176
    %61 = vst.msk [vmem:[#allocation2 + $0x7] sm:$0x1] %vm60, %v49
    %62 = vst.msk [vmem:[#allocation2 + $0x1] sm:$0x80] %vm58, %v32
    %63 = vst.msk [vmem:[#allocation2 + $0xf] sm:$0x1] %vm60, %v51
    %v64 = vld [vmem:[#allocation2] sm:$0xff]
    %v65 = vld [vmem:[#allocation2 + $0x8] sm:$0xff]
    %v66 = vld [vmem:[%s1] sm:$0xff]
    %v67 = vld [vmem:[%s1 + $0x8] sm:$0xf]
    %v68 = vld [vmem:[#allocation3] sm:$0xff]
    %v69 = vld [vmem:[#allocation3 + $0x8] sm:$0xff]
    %vm70 = vcmask 97280
    %v72 = vsel %vm70, %v64, 0
    %v75 = vsel %vm70, %v65, 0
    %vm77 = vcmask 1043456
    %v79 = vsel %vm77, %v67, 0
    %81 = vmatpush.msra.mxu0 0.0
    %82 = vmatpush.msra.mxu0 0.0
    %83 = vmatpush.msra.mxu0 0.0
    %84 = vmatpush.msra.mxu0 0.0
    %85 = vmatpush.msra.mxu0 0.0
    %86 = vmatpush.msra.mxu0 0.0
    %87 = vmatpush.msra.mxu0 0.0
    %88 = vmatpush.msra.mxu0 0.0
    %89 = vmatpush.msra.mxu0 0.0
    %90 = vmatpush.msra.mxu0 0.0
    %91 = vmatpush.msra.mxu0 0.0
    %92 = vmatpush.msra.mxu0 0.0
    %93 = vmatpush.msra.mxu0 0.0
    %94 = vmatpush.msra.mxu0 0.0
    %95 = vmatpush.msra.mxu0 %v79
    %96 = vmatpush.msra.mxu0 %v66
    %97 = vmatmul.f32.gmra.mxu0 %v72
    %v98 = vpop.f32.mrf.mxu0
    %v99 = vadd.f32 %v68, %v98
    %100 = vmatmul.f32.gmra.mxu0 %v75
    %v101 = vpop.f32.mrf.mxu0
    %v102 = vadd.f32 %v69, %v101
    %103 = vdwg.mxu0
    %vm104 = vcmask 261120
    %105 = vst.msk [vmem:[#allocation6] sm:$0xff] %vm104, %v99
    %106 = vst.msk [vmem:[#allocation6 + $0x8] sm:$0xff] %vm104, %v102
    // Predicated region
    $region18: #{tpu_custom_call.1} parent=1 // pred_check
      _
    $region19: #{tpu_custom_call.1} parent=1 // pred_check_branch
      %108 = sbr.rel (0) target = $region21
    $region20: #{tpu_custom_call.1} parent=1 // pred_region
      %110 = vsyncadd [#allocation5], 0
      %s111 = sshll.u32 [#allocation6], 4
      %s112 = int_to_ptr.vmem [resolvable:$true] %s111
      %s113 = sshll.u32 %s3, 4
      %s114 = int_to_ptr.hbm [resolvable:$true] %s113
      %119 = dma.vmem_to_hbm [thread:$0]  %s112, 256, %s114, [#allocation5], 128, 128, 8
    $region21: #{tpu_custom_call.1} parent=1 // pred_fallthru
      _
    // Predicated region
    $region22: #{tpu_custom_call.1} parent=1 // pred_check
      _
    $region23: #{tpu_custom_call.1} parent=1 // pred_check_branch
      %121 = sbr.rel (0) target = $region25
    $region24: #{tpu_custom_call.1} parent=1 // pred_region
      %123 = dma.done [#allocation5], 256
    $region25: #{tpu_custom_call.1} parent=1 // pred_fallthru
      _
    %124 = vsyncpa [#allocation4], 1
    %125 = vsyncpa [#allocation5], 1

</llo_original>
